<compile_context>
chip_gen: v5e
topology: v5e:2x2
jax: 0.10.0
libtpu: 0.0.40
codegen_flags: <defaults>
</compile_context>

<pallas_src>
import functools

import jax
import jax.numpy as jnp
from jax.experimental import pallas as pl
from jax.experimental.pallas import tpu as pltpu


def _running_window_max(x, k):
    """out[:, j] = max(x[:, j:j+k]).  x: (F, Lf) -> (F, Lf - k + 1)."""
    w = 1
    while w < k:
        shift = min(w, k - w)
        n = x.shape[1]
        x = jnp.maximum(x[:, :n - shift], x[:, shift:])
        w += shift
    return x


# -----------------------------------------------------------------------------
# Single fused kernel:
#   conv1(1x1) -> ReLU -> conv2(k=K2) -> ReLU -> maxpool(k,s) -> conv3(k=K3)
#   -> ReLU -> per-sample mean -> BatchNorm1d(batch stats) -> softmax
# All activations are (channels, N*L)-style slabs (batch folded on lanes).
# -----------------------------------------------------------------------------
def _cnn_bn_softmax_kernel(x_ref, w1_ref, b1_ref, w2_ref, b2_ref,
                           w3_ref, b3_ref, msel_ref, gamma_ref, beta_ref,
                           out_ref, *, pool_k, pool_s):
    F1 = w1_ref.shape[0]
    F2 = w2_ref.shape[0]
    K2 = w2_ref.shape[1] // F1
    K3 = w3_ref.shape[1] // F2

    # conv1 (kernel_size=1) + ReLU: one lane-dense MXU matmul over the batch.
    x = x_ref[...]                                        # (C_in, N*L)
    h1 = jnp.dot(w1_ref[...], x, preferred_element_type=jnp.float32)
    h1 = jnp.maximum(h1 + b1_ref[...], 0.0)               # (F1, N*L)

    # conv2 + ReLU: im2col — K2 lane-shifted views stacked on the sublane axis,
    # then a single matmul with the flattened (F2, K2*F1) weights.
    len2 = h1.shape[1] - (K2 - 1)
    col2 = jnp.concatenate([h1[:, k:k + len2] for k in range(K2)], axis=0)
    h2 = jnp.dot(w2_ref[...], col2, preferred_element_type=jnp.float32)
    h2 = jnp.maximum(h2 + b2_ref[...], 0.0)               # (F2, len2)

    # MaxPool1d(pool_k, pool_s): running window-pool_k max at every position.
    # (The stride-pool_s subsampling is folded into conv3's tap offsets and
    #  into the mean selector matmul below — no per-window slicing loops.)
    wmax = _running_window_max(h2, pool_k)                # (F2, lenw)
    lenw = wmax.shape[1]

    # conv3 + ReLU: taps are spaced pool_s apart on the un-subsampled axis.
    len3 = lenw - (K3 - 1) * pool_s
    col3 = jnp.concatenate(
        [wmax[:, k * pool_s:k * pool_s + len3] for k in range(K3)], axis=0)
    h3 = jnp.dot(w3_ref[...], col3, preferred_element_type=jnp.float32)
    h3 = jnp.maximum(h3 + b3_ref[...], 0.0)               # (F3, len3)

    # Per-sample mean over the length axis: one small matmul with a selector
    # that picks the valid (strided, per-sample) conv3 outputs and averages.
    m = jnp.dot(h3, msel_ref[...], preferred_element_type=jnp.float32)  # (F3, N)

    # BatchNorm1d (training mode: batch mean, biased variance, eps=1e-5).
    mu = jnp.mean(m, axis=1, keepdims=True)
    var = jnp.mean((m - mu) ** 2, axis=1, keepdims=True)
    y = (m - mu) * jax.lax.rsqrt(var + 1e-5) * gamma_ref[...] + beta_ref[...]

    # Softmax over the feature axis (axis 0 in the (F3, N) layout).
    z = y - jnp.max(y, axis=0, keepdims=True)
    e = jnp.exp(z)
    out_ref[...] = e / jnp.sum(e, axis=0, keepdims=True)   # (F3, N), stored once


# -----------------------------------------------------------------------------
# Wrapper
# -----------------------------------------------------------------------------
def simple_cnn_forward(x, params, *, pool_k=7, pool_s=6):
    w1, b1, w2, b2, w3, b3, gamma, beta = params
    N, C_in, L = x.shape
    F1 = w1.shape[0]
    F2, _, K2 = w2.shape
    F3, _, K3 = w3.shape

    L2 = L - K2 + 1
    P = (L2 - pool_k) // pool_s + 1
    L3 = P - K3 + 1
    assert L2 >= pool_k and L3 >= 1, "sequence too short for this config"
    assert pool_s < pool_k, "kernel assumes overlapping pooling (default 7/6)"

    # ---- layout plumbing (plain XLA glue outside the kernel) ----
    # Fold the batch onto the lane axis: x -> (C_in, N*L), per-sample stride L.
    x_flat = jnp.transpose(x, (1, 0, 2)).reshape(C_in, N * L)
    w1_2d = w1[:, :, 0]                                          # (F1, C_in)
    w2_f = jnp.transpose(w2, (0, 2, 1)).reshape(F2, K2 * F1)     # (F2, K2*F1)
    w3_f = jnp.transpose(w3, (0, 2, 1)).reshape(F3, K3 * F2)     # (F3, K3*F2)
    b1_c = b1.reshape(F1, 1)
    b2_c = b2.reshape(F2, 1)
    b3_c = b3.reshape(F3, 1)
    g_c = gamma.reshape(F3, 1)
    be_c = beta.reshape(F3, 1)

    # Mean/subsample selector: conv3's valid output for sample n, position t
    # lives at flat index n*L + t*pool_s (t < L3).  msel averages those into
    # column n; everything else (cross-sample garbage positions) gets weight 0.
    len3 = N * L - (K2 - 1) - (pool_k - 1) - (K3 - 1) * pool_s
    rows = jnp.arange(len3)
    r = rows % L
    n_idx = rows // L
    valid = (r % pool_s == 0) & (r // pool_s < L3)
    msel = jnp.where(
        valid[:, None] & (n_idx[:, None] == jnp.arange(N)[None, :]),
        jnp.float32(1.0 / L3), jnp.float32(0.0))                 # (len3, N)

    kernel = functools.partial(_cnn_bn_softmax_kernel,
                               pool_k=pool_k, pool_s=pool_s)
    out_t = pl.pallas_call(
        kernel,
        out_shape=jax.ShapeDtypeStruct((F3, N), jnp.float32),
        grid_spec=pltpu.PrefetchScalarGridSpec(
            num_scalar_prefetch=0,
            grid=(1,),
            in_specs=[
                pl.BlockSpec((C_in, N * L), lambda i: (0, 0)),
                pl.BlockSpec((F1, C_in), lambda i: (0, 0)),
                pl.BlockSpec((F1, 1), lambda i: (0, 0)),
                pl.BlockSpec((F2, K2 * F1), lambda i: (0, 0)),
                pl.BlockSpec((F2, 1), lambda i: (0, 0)),
                pl.BlockSpec((F3, K3 * F2), lambda i: (0, 0)),
                pl.BlockSpec((F3, 1), lambda i: (0, 0)),
                pl.BlockSpec((len3, N), lambda i: (0, 0)),
                pl.BlockSpec((F3, 1), lambda i: (0, 0)),
                pl.BlockSpec((F3, 1), lambda i: (0, 0)),
            ],
            out_specs=pl.BlockSpec((F3, N), lambda i: (0, 0)),
        ),
        compiler_params=pltpu.CompilerParams(
            dimension_semantics=("arbitrary",)),
    )(x_flat, w1_2d, b1_c, w2_f, b2_c, w3_f, b3_c, msel, g_c, be_c)

    return out_t.T                                               # (N, F3)


# -----------------------------------------------------------------------------
# Pure-JAX reference (for correctness check only)
# -----------------------------------------------------------------------------
def reference_forward(x, params, *, pool_k=7, pool_s=6):
    w1, b1, w2, b2, w3, b3, gamma, beta = params

    def conv1d(h, w, b):
        y = jax.lax.conv_general_dilated(
            h, w, window_strides=(1,), padding="VALID",
            dimension_numbers=("NCH", "OIH", "NCH"))
        return y + b[None, :, None]

    h = jax.nn.relu(conv1d(x, w1, b1))
    h = jax.nn.relu(conv1d(h, w2, b2))
    h = jax.lax.reduce_window(h, -jnp.inf, jax.lax.max,
                              (1, 1, pool_k), (1, 1, pool_s), "VALID")
    h = jax.nn.relu(conv1d(h, w3, b3))
    m = jnp.mean(h, axis=-1)                                     # (N, 4)
    mu = jnp.mean(m, axis=0, keepdims=True)
    var = jnp.mean((m - mu) ** 2, axis=0, keepdims=True)
    y = (m - mu) * jax.lax.rsqrt(var + 1e-5) * gamma[None, :] + beta[None, :]
    return jax.nn.softmax(y, axis=1)


if __name__ == "__main__":
    # simpleCNN defaults; L must satisfy (L-4-7)//6 + 1 >= 5, so L = 64.
    N, C_in, L = 8, 4, 64
    F1, F2, F3 = 16, 32, 4
    K2, K3 = 5, 5

    key = jax.random.PRNGKey(0)
    ks = jax.random.split(key, 9)
    w1 = jax.random.normal(ks[0], (F1, C_in, 1), jnp.float32) * 0.2
    b1 = jax.random.normal(ks[1], (F1,), jnp.float32) * 0.1
    w2 = jax.random.normal(ks[2], (F2, F1, K2), jnp.float32) * 0.2
    b2 = jax.random.normal(ks[3], (F2,), jnp.float32) * 0.1
    w3 = jax.random.normal(ks[4], (F3, F2, K3), jnp.float32) * 0.2
    b3 = jax.random.normal(ks[5], (F3,), jnp.float32) * 0.1
    gamma = 1.0 + 0.1 * jax.random.normal(ks[6], (F3,), jnp.float32)
    beta = 0.1 * jax.random.normal(ks[7], (F3,), jnp.float32)
    params = (w1, b1, w2, b2, w3, b3, gamma, beta)

    x = jax.random.normal(ks[8], (N, C_in, L), jnp.float32)

    out = jax.block_until_ready(simple_cnn_forward(x, params))
    ref = jax.block_until_ready(reference_forward(x, params))

    assert out.shape == (N, F3), out.shape
    if not jnp.allclose(out, ref, rtol=2e-2, atol=2e-2):
        raise AssertionError(f"Pallas/ref mismatch:\n{out}\nvs\n{ref}")
    print("KERNEL_OK")
</pallas_src>

<mosaic_0001>
module attributes {stable_mosaic.version = 11 : i64} {
  func.func @_cnn_bn_softmax_kernel(%arg0: i32, %arg1: memref<4x512xf32, #tpu.memory_space<vmem>>, %arg2: memref<16x4xf32, #tpu.memory_space<vmem>>, %arg3: memref<16x1xf32, #tpu.memory_space<vmem>>, %arg4: memref<32x80xf32, #tpu.memory_space<vmem>>, %arg5: memref<32x1xf32, #tpu.memory_space<vmem>>, %arg6: memref<4x160xf32, #tpu.memory_space<vmem>>, %arg7: memref<4x1xf32, #tpu.memory_space<vmem>>, %arg8: memref<478x8xf32, #tpu.memory_space<vmem>>, %arg9: memref<4x1xf32, #tpu.memory_space<vmem>>, %arg10: memref<4x1xf32, #tpu.memory_space<vmem>>, %arg11: memref<4x8xf32, #tpu.memory_space<vmem>>) attributes {dimension_semantics = [#tpu.dimension_semantics<arbitrary>], iteration_bounds = array<i64: 1>, scalar_prefetch = 0 : i64, scratch_operands = 0 : i64, tpu.core_type = #tpu.core_type<tc>, window_params = [{pipeline_mode = #tpu.pipeline_mode<synchronous>, transform_indices = @transform_0, window_bounds = array<i64: 4, 512>}, {pipeline_mode = #tpu.pipeline_mode<synchronous>, transform_indices = @transform_1, window_bounds = array<i64: 16, 4>}, {pipeline_mode = #tpu.pipeline_mode<synchronous>, transform_indices = @transform_2, window_bounds = array<i64: 16, 1>}, {pipeline_mode = #tpu.pipeline_mode<synchronous>, transform_indices = @transform_3, window_bounds = array<i64: 32, 80>}, {pipeline_mode = #tpu.pipeline_mode<synchronous>, transform_indices = @transform_4, window_bounds = array<i64: 32, 1>}, {pipeline_mode = #tpu.pipeline_mode<synchronous>, transform_indices = @transform_5, window_bounds = array<i64: 4, 160>}, {pipeline_mode = #tpu.pipeline_mode<synchronous>, transform_indices = @transform_6, window_bounds = array<i64: 4, 1>}, {pipeline_mode = #tpu.pipeline_mode<synchronous>, transform_indices = @transform_7, window_bounds = array<i64: 478, 8>}, {pipeline_mode = #tpu.pipeline_mode<synchronous>, transform_indices = @transform_8, window_bounds = array<i64: 4, 1>}, {pipeline_mode = #tpu.pipeline_mode<synchronous>, transform_indices = @transform_9, window_bounds = array<i64: 4, 1>}, {pipeline_mode = #tpu.pipeline_mode<synchronous>, transform_indices = @transform_10, window_bounds = array<i64: 4, 8>}]} {
    %c0 = arith.constant 0 : index
    %c0_0 = arith.constant 0 : index
    %0 = vector.load %arg1[%c0, %c0_0] : memref<4x512xf32, #tpu.memory_space<vmem>>, vector<4x512xf32>
    %c0_1 = arith.constant 0 : index
    %c0_2 = arith.constant 0 : index
    %1 = vector.load %arg2[%c0_1, %c0_2] : memref<16x4xf32, #tpu.memory_space<vmem>>, vector<16x4xf32>
    %cst = arith.constant dense<0.000000e+00> : vector<16x512xf32>
    %2 = tpu.matmul %1, %0, %cst {dimension_numbers = #tpu.dot_dimension_numbers<[1], [0], [0], [1], [0, 0, 1, 1], [], []>} : vector<16x4xf32>, vector<4x512xf32>, vector<16x512xf32> -> vector<16x512xf32>
    %c0_3 = arith.constant 0 : index
    %c0_4 = arith.constant 0 : index
    %3 = vector.load %arg3[%c0_3, %c0_4] : memref<16x1xf32, #tpu.memory_space<vmem>>, vector<16x1xf32>
    %4 = vector.broadcast %3 : vector<16x1xf32> to vector<16x512xf32>
    %5 = arith.addf %2, %4 : vector<16x512xf32>
    %cst_5 = arith.constant 0.000000e+00 : f32
    %6 = vector.broadcast %cst_5 : f32 to vector<16x512xf32>
    %7 = arith.maximumf %5, %6 : vector<16x512xf32>
    %8 = vector.extract_strided_slice %7 {offsets = [0, 0], sizes = [16, 508], strides = [1, 1]} : vector<16x512xf32> to vector<16x508xf32>
    %9 = vector.extract_strided_slice %7 {offsets = [0, 1], sizes = [16, 508], strides = [1, 1]} : vector<16x512xf32> to vector<16x508xf32>
    %10 = vector.extract_strided_slice %7 {offsets = [0, 2], sizes = [16, 508], strides = [1, 1]} : vector<16x512xf32> to vector<16x508xf32>
    %11 = vector.extract_strided_slice %7 {offsets = [0, 3], sizes = [16, 508], strides = [1, 1]} : vector<16x512xf32> to vector<16x508xf32>
    %12 = vector.extract_strided_slice %7 {offsets = [0, 4], sizes = [16, 508], strides = [1, 1]} : vector<16x512xf32> to vector<16x508xf32>
    %13 = tpu.concatenate %8, %9, %10, %11, %12 in 0 : vector<16x508xf32>, vector<16x508xf32>, vector<16x508xf32>, vector<16x508xf32>, vector<16x508xf32> -> vector<80x508xf32>
    %c0_6 = arith.constant 0 : index
    %c0_7 = arith.constant 0 : index
    %14 = vector.load %arg4[%c0_6, %c0_7] : memref<32x80xf32, #tpu.memory_space<vmem>>, vector<32x80xf32>
    %cst_8 = arith.constant dense<0.000000e+00> : vector<32x508xf32>
    %15 = tpu.matmul %14, %13, %cst_8 {dimension_numbers = #tpu.dot_dimension_numbers<[1], [0], [0], [1], [0, 0, 1, 1], [], []>} : vector<32x80xf32>, vector<80x508xf32>, vector<32x508xf32> -> vector<32x508xf32>
    %c0_9 = arith.constant 0 : index
    %c0_10 = arith.constant 0 : index
    %16 = vector.load %arg5[%c0_9, %c0_10] : memref<32x1xf32, #tpu.memory_space<vmem>>, vector<32x1xf32>
    %17 = vector.broadcast %16 : vector<32x1xf32> to vector<32x508xf32>
    %18 = arith.addf %15, %17 : vector<32x508xf32>
    %cst_11 = arith.constant 0.000000e+00 : f32
    %19 = vector.broadcast %cst_11 : f32 to vector<32x508xf32>
    %20 = arith.maximumf %18, %19 : vector<32x508xf32>
    %21 = vector.extract_strided_slice %20 {offsets = [0, 0], sizes = [32, 507], strides = [1, 1]} : vector<32x508xf32> to vector<32x507xf32>
    %22 = vector.extract_strided_slice %20 {offsets = [0, 1], sizes = [32, 507], strides = [1, 1]} : vector<32x508xf32> to vector<32x507xf32>
    %23 = arith.maximumf %21, %22 : vector<32x507xf32>
    %24 = vector.extract_strided_slice %23 {offsets = [0, 0], sizes = [32, 505], strides = [1, 1]} : vector<32x507xf32> to vector<32x505xf32>
    %25 = vector.extract_strided_slice %23 {offsets = [0, 2], sizes = [32, 505], strides = [1, 1]} : vector<32x507xf32> to vector<32x505xf32>
    %26 = arith.maximumf %24, %25 : vector<32x505xf32>
    %27 = vector.extract_strided_slice %26 {offsets = [0, 0], sizes = [32, 502], strides = [1, 1]} : vector<32x505xf32> to vector<32x502xf32>
    %28 = vector.extract_strided_slice %26 {offsets = [0, 3], sizes = [32, 502], strides = [1, 1]} : vector<32x505xf32> to vector<32x502xf32>
    %29 = arith.maximumf %27, %28 : vector<32x502xf32>
    %30 = vector.extract_strided_slice %29 {offsets = [0, 0], sizes = [32, 478], strides = [1, 1]} : vector<32x502xf32> to vector<32x478xf32>
    %31 = vector.extract_strided_slice %29 {offsets = [0, 6], sizes = [32, 478], strides = [1, 1]} : vector<32x502xf32> to vector<32x478xf32>
    %32 = vector.extract_strided_slice %29 {offsets = [0, 12], sizes = [32, 478], strides = [1, 1]} : vector<32x502xf32> to vector<32x478xf32>
    %33 = vector.extract_strided_slice %29 {offsets = [0, 18], sizes = [32, 478], strides = [1, 1]} : vector<32x502xf32> to vector<32x478xf32>
    %34 = vector.extract_strided_slice %29 {offsets = [0, 24], sizes = [32, 478], strides = [1, 1]} : vector<32x502xf32> to vector<32x478xf32>
    %35 = tpu.concatenate %30, %31, %32, %33, %34 in 0 : vector<32x478xf32>, vector<32x478xf32>, vector<32x478xf32>, vector<32x478xf32>, vector<32x478xf32> -> vector<160x478xf32>
    %c0_12 = arith.constant 0 : index
    %c0_13 = arith.constant 0 : index
    %36 = vector.load %arg6[%c0_12, %c0_13] : memref<4x160xf32, #tpu.memory_space<vmem>>, vector<4x160xf32>
    %cst_14 = arith.constant dense<0.000000e+00> : vector<4x478xf32>
    %37 = tpu.matmul %36, %35, %cst_14 {dimension_numbers = #tpu.dot_dimension_numbers<[1], [0], [0], [1], [0, 0, 1, 1], [], []>} : vector<4x160xf32>, vector<160x478xf32>, vector<4x478xf32> -> vector<4x478xf32>
    %c0_15 = arith.constant 0 : index
    %c0_16 = arith.constant 0 : index
    %38 = vector.load %arg7[%c0_15, %c0_16] : memref<4x1xf32, #tpu.memory_space<vmem>>, vector<4x1xf32>
    %39 = vector.broadcast %38 : vector<4x1xf32> to vector<4x478xf32>
    %40 = arith.addf %37, %39 : vector<4x478xf32>
    %cst_17 = arith.constant 0.000000e+00 : f32
    %41 = vector.broadcast %cst_17 : f32 to vector<4x478xf32>
    %42 = arith.maximumf %40, %41 : vector<4x478xf32>
    %c0_18 = arith.constant 0 : index
    %c0_19 = arith.constant 0 : index
    %43 = vector.load %arg8[%c0_18, %c0_19] : memref<478x8xf32, #tpu.memory_space<vmem>>, vector<478x8xf32>
    %cst_20 = arith.constant dense<0.000000e+00> : vector<4x8xf32>
    %44 = tpu.matmul %42, %43, %cst_20 {dimension_numbers = #tpu.dot_dimension_numbers<[1], [0], [0], [1], [0, 0, 1, 1], [], []>} : vector<4x478xf32>, vector<478x8xf32>, vector<4x8xf32> -> vector<4x8xf32>
    %cst_21 = arith.constant dense<0.000000e+00> : vector<4xf32>
    %45 = vector.multi_reduction <add>, %44, %cst_21 [1] : vector<4x8xf32> to vector<4xf32>
    %46 = vector.shape_cast %45 : vector<4xf32> to vector<4x1xf32>
    %cst_22 = arith.constant 8.000000e+00 : f32
    %47 = vector.broadcast %cst_22 : f32 to vector<4x1xf32>
    %48 = arith.divf %46, %47 : vector<4x1xf32>
    %49 = vector.broadcast %48 : vector<4x1xf32> to vector<4x8xf32>
    %50 = arith.subf %44, %49 : vector<4x8xf32>
    %51 = arith.mulf %50, %50 : vector<4x8xf32>
    %cst_23 = arith.constant dense<0.000000e+00> : vector<4xf32>
    %52 = vector.multi_reduction <add>, %51, %cst_23 [1] : vector<4x8xf32> to vector<4xf32>
    %53 = vector.shape_cast %52 : vector<4xf32> to vector<4x1xf32>
    %cst_24 = arith.constant 8.000000e+00 : f32
    %54 = vector.broadcast %cst_24 : f32 to vector<4x1xf32>
    %55 = arith.divf %53, %54 : vector<4x1xf32>
    %56 = vector.broadcast %48 : vector<4x1xf32> to vector<4x8xf32>
    %57 = arith.subf %44, %56 : vector<4x8xf32>
    %cst_25 = arith.constant 9.99999974E-6 : f32
    %58 = vector.broadcast %cst_25 : f32 to vector<4x1xf32>
    %59 = arith.addf %55, %58 : vector<4x1xf32>
    %60 = math.rsqrt %59 : vector<4x1xf32>
    %61 = vector.broadcast %60 : vector<4x1xf32> to vector<4x8xf32>
    %62 = arith.mulf %57, %61 : vector<4x8xf32>
    %c0_26 = arith.constant 0 : index
    %c0_27 = arith.constant 0 : index
    %63 = vector.load %arg9[%c0_26, %c0_27] : memref<4x1xf32, #tpu.memory_space<vmem>>, vector<4x1xf32>
    %64 = vector.broadcast %63 : vector<4x1xf32> to vector<4x8xf32>
    %65 = arith.mulf %62, %64 : vector<4x8xf32>
    %c0_28 = arith.constant 0 : index
    %c0_29 = arith.constant 0 : index
    %66 = vector.load %arg10[%c0_28, %c0_29] : memref<4x1xf32, #tpu.memory_space<vmem>>, vector<4x1xf32>
    %67 = vector.broadcast %66 : vector<4x1xf32> to vector<4x8xf32>
    %68 = arith.addf %65, %67 : vector<4x8xf32>
    %cst_30 = arith.constant dense<0xFF800000> : vector<8xf32>
    %69 = vector.multi_reduction <maximumf>, %68, %cst_30 [0] : vector<4x8xf32> to vector<8xf32>
    %70 = vector.shape_cast %69 : vector<8xf32> to vector<1x8xf32>
    %71 = vector.broadcast %70 : vector<1x8xf32> to vector<4x8xf32>
    %72 = arith.subf %68, %71 : vector<4x8xf32>
    %73 = math.exp %72 : vector<4x8xf32>
    %cst_31 = arith.constant dense<0.000000e+00> : vector<8xf32>
    %74 = vector.multi_reduction <add>, %73, %cst_31 [0] : vector<4x8xf32> to vector<8xf32>
    %75 = vector.shape_cast %74 : vector<8xf32> to vector<1x8xf32>
    %76 = vector.broadcast %75 : vector<1x8xf32> to vector<4x8xf32>
    %77 = arith.divf %73, %76 : vector<4x8xf32>
    %c0_32 = arith.constant 0 : index
    %c0_33 = arith.constant 0 : index
    %78 = vector.load %arg11[%c0_32, %c0_33] : memref<4x8xf32, #tpu.memory_space<vmem>>, vector<4x8xf32>
    tpu.vector_store %arg11[%c0_32, %c0_33], %77 {strides = array<i32>} : memref<4x8xf32, #tpu.memory_space<vmem>>, vector<4x8xf32>,
    return
  }
  func.func @transform_0(%arg0: i32) -> (i32, i32) {
    %c0_i32 = arith.constant 0 : i32
    %c0_i32_0 = arith.constant 0 : i32
    %c0_i32_1 = arith.constant 0 : i32
    return %c0_i32, %c0_i32_0 : i32, i32
  }
  func.func @transform_1(%arg0: i32) -> (i32, i32) {
    %c0_i32 = arith.constant 0 : i32
    %c0_i32_0 = arith.constant 0 : i32
    %c0_i32_1 = arith.constant 0 : i32
    return %c0_i32, %c0_i32_0 : i32, i32
  }
  func.func @transform_2(%arg0: i32) -> (i32, i32) {
    %c0_i32 = arith.constant 0 : i32
    %c0_i32_0 = arith.constant 0 : i32
    %c0_i32_1 = arith.constant 0 : i32
    return %c0_i32, %c0_i32_0 : i32, i32
  }
  func.func @transform_3(%arg0: i32) -> (i32, i32) {
    %c0_i32 = arith.constant 0 : i32
    %c0_i32_0 = arith.constant 0 : i32
    %c0_i32_1 = arith.constant 0 : i32
    return %c0_i32, %c0_i32_0 : i32, i32
  }
  func.func @transform_4(%arg0: i32) -> (i32, i32) {
    %c0_i32 = arith.constant 0 : i32
    %c0_i32_0 = arith.constant 0 : i32
    %c0_i32_1 = arith.constant 0 : i32
    return %c0_i32, %c0_i32_0 : i32, i32
  }
  func.func @transform_5(%arg0: i32) -> (i32, i32) {
    %c0_i32 = arith.constant 0 : i32
    %c0_i32_0 = arith.constant 0 : i32
    %c0_i32_1 = arith.constant 0 : i32
    return %c0_i32, %c0_i32_0 : i32, i32
  }
  func.func @transform_6(%arg0: i32) -> (i32, i32) {
    %c0_i32 = arith.constant 0 : i32
    %c0_i32_0 = arith.constant 0 : i32
    %c0_i32_1 = arith.constant 0 : i32
    return %c0_i32, %c0_i32_0 : i32, i32
  }
  func.func @transform_7(%arg0: i32) -> (i32, i32) {
    %c0_i32 = arith.constant 0 : i32
    %c0_i32_0 = arith.constant 0 : i32
    %c0_i32_1 = arith.constant 0 : i32
    return %c0_i32, %c0_i32_0 : i32, i32
  }
  func.func @transform_8(%arg0: i32) -> (i32, i32) {
    %c0_i32 = arith.constant 0 : i32
    %c0_i32_0 = arith.constant 0 : i32
    %c0_i32_1 = arith.constant 0 : i32
    return %c0_i32, %c0_i32_0 : i32, i32
  }
  func.func @transform_9(%arg0: i32) -> (i32, i32) {
    %c0_i32 = arith.constant 0 : i32
    %c0_i32_0 = arith.constant 0 : i32
    %c0_i32_1 = arith.constant 0 : i32
    return %c0_i32, %c0_i32_0 : i32, i32
  }
  func.func @transform_10(%arg0: i32) -> (i32, i32) {
    %c0_i32 = arith.constant 0 : i32
    %c0_i32_0 = arith.constant 0 : i32
    %c0_i32_1 = arith.constant 0 : i32
    return %c0_i32, %c0_i32_0 : i32, i32
  }
}

</mosaic_0001>

<llo_original>
// kernel: tpu_custom_call.1
$region0: #{tpu_custom_call.1}
  #allocation0 [shape = 'u32[]', space=smem, size = 0x4, offset = 0x4, fixed_abs, tag = 'smem constant byte address 0x4 - core index']
  #allocation1 [shape = 'u32[72,128]{1,0:T(1,128)}', space=vmem, size = 0x9000, scoped, tag = 'internal scratch']
  %s0 = inlined_call_operand.vmem [shape: f32[4,512], index: 0, kind: input, shape index: {}]
  %s1 = inlined_call_operand.vmem [shape: f32[16,4], index: 1, kind: input, shape index: {}]
  %s2 = inlined_call_operand.vmem [shape: f32[16,1], index: 2, kind: input, shape index: {}]
  %s3 = inlined_call_operand.vmem [shape: f32[32,80], index: 3, kind: input, shape index: {}]
  %s4 = inlined_call_operand.vmem [shape: f32[32,1], index: 4, kind: input, shape index: {}]
  %s5 = inlined_call_operand.vmem [shape: f32[4,160], index: 5, kind: input, shape index: {}]
  %s6 = inlined_call_operand.vmem [shape: f32[4,1], index: 6, kind: input, shape index: {}]
  %s7 = inlined_call_operand.vmem [shape: f32[478,8], index: 7, kind: input, shape index: {}]
  %s8 = inlined_call_operand.vmem [shape: f32[4,1], index: 8, kind: input, shape index: {}]
  %s9 = inlined_call_operand.vmem [shape: f32[4,1], index: 9, kind: input, shape index: {}]
  %s10 = inlined_call_operand.hbm [shape: f32[4,8], index: 10, kind: output, shape index: {}]
  %s11 = sld [smem:[#allocation0]]
  $region50: #{tpu_custom_call.1} parent=0
    _
  %s13 = ssub.s32 1, %s11
  %s14 = scalar_select 0, %s13, %s11
  $region1: #{tpu_custom_call.1} parent=0
    #allocation2 [shape = 'u8[2048]{0}', space=vmem, size = 0x800, scoped, tag = 'output window, operand 0, single buffered']
    #allocation3 [shape = 's32[1]{0}', space=sflag, size = 0x4, scoped, tag = 'scoped memory for tpu_custom_call.1']
    %15 = vsyncpa [#allocation3], 0
    // Predicated region
    $region2: #{tpu_custom_call.1} parent=1 // pred_check
      _
    $region3: #{tpu_custom_call.1} parent=1 // pred_check_branch
      %17 = sbr.rel (0) target = $region5
    $region4: #{tpu_custom_call.1} parent=1 // pred_region
      _
    $region5: #{tpu_custom_call.1} parent=1 // pred_fallthru
      _
    // Predicated region
    $region6: #{tpu_custom_call.1} parent=1 // pred_check
      _
    $region7: #{tpu_custom_call.1} parent=1 // pred_check_branch
      %19 = sbr.rel (0) target = $region9
    $region8: #{tpu_custom_call.1} parent=1 // pred_region
      _
    $region9: #{tpu_custom_call.1} parent=1 // pred_fallthru
      _
    // Predicated region
    $region10: #{tpu_custom_call.1} parent=1 // pred_check
      _
    $region11: #{tpu_custom_call.1} parent=1 // pred_check_branch
      %21 = sbr.rel (0) target = $region13
    $region12: #{tpu_custom_call.1} parent=1 // pred_region
      _
    $region13: #{tpu_custom_call.1} parent=1 // pred_fallthru
      _
    // Predicated region
    $region14: #{tpu_custom_call.1} parent=1 // pred_check
      _
    $region15: #{tpu_custom_call.1} parent=1 // pred_check_branch
      %23 = sbr.rel (0) target = $region17
    $region16: #{tpu_custom_call.1} parent=1 // pred_region
      _
    $region17: #{tpu_custom_call.1} parent=1 // pred_fallthru
      _
    // Predicated region
    $region18: #{tpu_custom_call.1} parent=1 // pred_check
      _
    $region19: #{tpu_custom_call.1} parent=1 // pred_check_branch
      %25 = sbr.rel (0) target = $region21
    $region20: #{tpu_custom_call.1} parent=1 // pred_region
      _
    $region21: #{tpu_custom_call.1} parent=1 // pred_fallthru
      _
    // Predicated region
    $region22: #{tpu_custom_call.1} parent=1 // pred_check
      _
    $region23: #{tpu_custom_call.1} parent=1 // pred_check_branch
      %27 = sbr.rel (0) target = $region25
    $region24: #{tpu_custom_call.1} parent=1 // pred_region
      _
    $region25: #{tpu_custom_call.1} parent=1 // pred_fallthru
      _
    // Predicated region
    $region26: #{tpu_custom_call.1} parent=1 // pred_check
      _
    $region27: #{tpu_custom_call.1} parent=1 // pred_check_branch
      %29 = sbr.rel (0) target = $region29
    $region28: #{tpu_custom_call.1} parent=1 // pred_region
      _
    $region29: #{tpu_custom_call.1} parent=1 // pred_fallthru
      _
    // Predicated region
    $region30: #{tpu_custom_call.1} parent=1 // pred_check
      _
    $region31: #{tpu_custom_call.1} parent=1 // pred_check_branch
      %31 = sbr.rel (0) target = $region33
    $region32: #{tpu_custom_call.1} parent=1 // pred_region
      _
    $region33: #{tpu_custom_call.1} parent=1 // pred_fallthru
      _
    // Predicated region
    $region34: #{tpu_custom_call.1} parent=1 // pred_check
      _
    $region35: #{tpu_custom_call.1} parent=1 // pred_check_branch
      %33 = sbr.rel (0) target = $region37
    $region36: #{tpu_custom_call.1} parent=1 // pred_region
      _
    $region37: #{tpu_custom_call.1} parent=1 // pred_fallthru
      _
    // Predicated region
    $region38: #{tpu_custom_call.1} parent=1 // pred_check
      _
    $region39: #{tpu_custom_call.1} parent=1 // pred_check_branch
      %35 = sbr.rel (0) target = $region41
    $region40: #{tpu_custom_call.1} parent=1 // pred_region
      _
    $region41: #{tpu_custom_call.1} parent=1 // pred_fallthru
      _
    %v36 = vld [vmem:[%s0] sm:$0xff]
    %v37 = vld [vmem:[%s0 + $0x8] sm:$0xff]
    %v38 = vld [vmem:[%s1] sm:$0xff]
    %v39 = vld [vmem:[%s1 + $0x8] sm:$0xff]
    %v40 = vld [vmem:[%s2] sm:$0xff]
    %v41 = vld [vmem:[%s2 + $0x8] sm:$0xff]
    %43 = vset.pattern.permute.xlu0 0
    %44 = vperm.xlu0 %43, %v40
    %v45 = vpop.permute.xlu0 %44
    %48 = vset.pattern.permute.xlu0 0
    %49 = vperm.xlu0 %48, %v41
    %v50 = vpop.permute.xlu0 %49
    %54 = vst [vmem:[#allocation1] ss:$2 sm:$0xff] %v36
    %s55 = scalar_lea.vmem [#allocation1], 16
    %56 = vst [vmem:[%s55] ss:$2 sm:$0xff] %v37
    %v57 = vld.sshfl [vmem:[#allocation1] sm:$0xff pattern:$0x75316420]
    %v58 = vld.sshfl [vmem:[#allocation1 + $0x8] sm:$0xff pattern:$0x75316420]
    %v59 = vld.sshfl [vmem:[#allocation1 + $0x10] sm:$0xff pattern:$0x75316420]
    %v60 = vld.sshfl [vmem:[#allocation1 + $0x18] sm:$0xff pattern:$0x75316420]
    %vm61 = vcmask 31744
    %v63 = vsel %vm61, %v38, 0
    %v66 = vsel %vm61, %v39, 0
    %vm68 = vcmask 1043456
    %v69 = vsel %vm68, %v57, 0
    %v71 = vsel %vm68, %v58, 0
    %v73 = vsel %vm68, %v59, 0
    %v75 = vsel %vm68, %v60, 0
    %77 = vmatpush.msra.mxu0 0.0
    %78 = vmatpush.msra.mxu0 0.0
    %79 = vmatpush.msra.mxu0 0.0
    %80 = vmatpush.msra.mxu0 0.0
    %81 = vmatpush.msra.mxu0 0.0
    %82 = vmatpush.msra.mxu0 0.0
    %83 = vmatpush.msra.mxu0 0.0
    %84 = vmatpush.msra.mxu0 0.0
    %85 = vmatpush.msra.mxu0 0.0
    %86 = vmatpush.msra.mxu0 0.0
    %87 = vmatpush.msra.mxu0 0.0
    %88 = vmatpush.msra.mxu0 0.0
    %89 = vmatpush.msra.mxu0 0.0
    %90 = vmatpush.msra.mxu0 0.0
    %91 = vmatpush.msra.mxu0 0.0
    %92 = vmatpush.msra.mxu0 %v69
    %93 = vmatmul.f32.gmra.mxu0 %v63
    %v94 = vpop.f32.mrf.mxu0
    %v95 = vadd.f32 %v45, %v94
    %96 = vmatmul.f32.gmra.mxu0 %v66
    %v97 = vpop.f32.mrf.mxu0
    %v98 = vadd.f32 %v50, %v97
    %99 = vdwg.mxu0
    %100 = vmatpush.msra.mxu0 0.0
    %101 = vmatpush.msra.mxu0 0.0
    %102 = vmatpush.msra.mxu0 0.0
    %103 = vmatpush.msra.mxu0 0.0
    %104 = vmatpush.msra.mxu0 0.0
    %105 = vmatpush.msra.mxu0 0.0
    %106 = vmatpush.msra.mxu0 0.0
    %107 = vmatpush.msra.mxu0 0.0
    %108 = vmatpush.msra.mxu0 0.0
    %109 = vmatpush.msra.mxu0 0.0
    %110 = vmatpush.msra.mxu0 0.0
    %111 = vmatpush.msra.mxu0 0.0
    %112 = vmatpush.msra.mxu0 0.0
    %113 = vmatpush.msra.mxu0 0.0
    %114 = vmatpush.msra.mxu0 0.0
    %115 = vmatpush.msra.mxu0 %v71
    %116 = vmatmul.f32.gmra.mxu0 %v63
    %v117 = vpop.f32.mrf.mxu0
    %v118 = vadd.f32 %v45, %v117
    %119 = vmatmul.f32.gmra.mxu0 %v66
    %v120 = vpop.f32.mrf.mxu0
    %v121 = vadd.f32 %v50, %v120
    %122 = vdwg.mxu0
    %123 = vmatpush.msra.mxu0 0.0
    %124 = vmatpush.msra.mxu0 0.0
    %125 = vmatpush.msra.mxu0 0.0
    %126 = vmatpush.msra.mxu0 0.0
    %127 = vmatpush.msra.mxu0 0.0
    %128 = vmatpush.msra.mxu0 0.0
    %129 = vmatpush.msra.mxu0 0.0
    %130 = vmatpush.msra.mxu0 0.0
    %131 = vmatpush.msra.mxu0 0.0
    %132 = vmatpush.msra.mxu0 0.0
    %133 = vmatpush.msra.mxu0 0.0
    %134 = vmatpush.msra.mxu0 0.0
    %135 = vmatpush.msra.mxu0 0.0
    %136 = vmatpush.msra.mxu0 0.0
    %137 = vmatpush.msra.mxu0 0.0
    %138 = vmatpush.msra.mxu0 %v73
    %139 = vmatmul.f32.gmra.mxu0 %v63
    %v140 = vpop.f32.mrf.mxu0
    %v141 = vadd.f32 %v45, %v140
    %142 = vmatmul.f32.gmra.mxu0 %v66
    %v143 = vpop.f32.mrf.mxu0
    %v144 = vadd.f32 %v50, %v143
    %145 = vdwg.mxu0
    %146 = vmatpush.msra.mxu0 0.0
    %147 = vmatpush.msra.mxu0 0.0
    %148 = vmatpush.msra.mxu0 0.0
    %149 = vmatpush.msra.mxu0 0.0
    %150 = vmatpush.msra.mxu0 0.0
    %151 = vmatpush.msra.mxu0 0.0
    %152 = vmatpush.msra.mxu0 0.0
    %153 = vmatpush.msra.mxu0 0.0
    %154 = vmatpush.msra.mxu0 0.0
    %155 = vmatpush.msra.mxu0 0.0
    %156 = vmatpush.msra.mxu0 0.0
    %157 = vmatpush.msra.mxu0 0.0
    %158 = vmatpush.msra.mxu0 0.0
    %159 = vmatpush.msra.mxu0 0.0
    %160 = vmatpush.msra.mxu0 0.0
    %161 = vmatpush.msra.mxu0 %v75
    %162 = vmatmul.f32.gmra.mxu0 %v63
    %v163 = vpop.f32.mrf.mxu0
    %v164 = vadd.f32 %v45, %v163
    %165 = vmatmul.f32.gmra.mxu0 %v66
    %v166 = vpop.f32.mrf.mxu0
    %v167 = vadd.f32 %v50, %v166
    %168 = vdwg.mxu0
    %v169 = vmax.f32 %v95, 0.0
    %v170 = vmax.f32 %v118, 0.0
    %v171 = vmax.f32 %v141, 0.0
    %v172 = vmax.f32 %v164, 0.0
    %v173 = vmax.f32 %v98, 0.0
    %v174 = vmax.f32 %v121, 0.0
    %v175 = vmax.f32 %v144, 0.0
    %v176 = vmax.f32 %v167, 0.0
    %185 = vrot.lane.b32.xlu0 %v169, 127
    %v186 = vpop.permute.xlu0 %185
    %187 = vrot.lane.b32.xlu0 %v170, 127
    %v188 = vpop.permute.xlu0 %187
    %189 = vrot.lane.b32.xlu0 %v171, 127
    %v190 = vpop.permute.xlu0 %189
    %191 = vrot.lane.b32.xlu0 %v172, 127
    %v192 = vpop.permute.xlu0 %191
    %193 = vrot.lane.b32.xlu0 %v173, 127
    %v194 = vpop.permute.xlu0 %193
    %195 = vrot.lane.b32.xlu0 %v174, 127
    %v196 = vpop.permute.xlu0 %195
    %197 = vrot.lane.b32.xlu0 %v175, 127
    %v198 = vpop.permute.xlu0 %197
    %199 = vrot.lane.b32.xlu0 %v176, 127
    %v200 = vpop.permute.xlu0 %199
    %vm201 = vcmask 1039360
    %v202 = vsel %vm201, %v186, %v188
    %v203 = vsel %vm201, %v188, %v190
    %v204 = vsel %vm201, %v190, %v192
    %v205 = vsel %vm201, %v194, %v196
    %v206 = vsel %vm201, %v196, %v198
    %v207 = vsel %vm201, %v198, %v200
    %216 = vrot.lane.b32.xlu0 %v169, 126
    %v217 = vpop.permute.xlu0 %216
    %218 = vrot.lane.b32.xlu0 %v170, 126
    %v219 = vpop.permute.xlu0 %218
    %220 = vrot.lane.b32.xlu0 %v171, 126
    %v221 = vpop.permute.xlu0 %220
    %222 = vrot.lane.b32.xlu0 %v172, 126
    %v223 = vpop.permute.xlu0 %222
    %224 = vrot.lane.b32.xlu0 %v173, 126
    %v225 = vpop.permute.xlu0 %224
    %226 = vrot.lane.b32.xlu0 %v174, 126
    %v227 = vpop.permute.xlu0 %226
    %228 = vrot.lane.b32.xlu0 %v175, 126
    %v229 = vpop.permute.xlu0 %228
    %230 = vrot.lane.b32.xlu0 %v176, 126
    %v231 = vpop.permute.xlu0 %230
    %vm232 = vcmask 1031168
    %v233 = vsel %vm232, %v217, %v219
    %v234 = vsel %vm232, %v219, %v221
    %v235 = vsel %vm232, %v221, %v223
    %v236 = vsel %vm232, %v225, %v227
    %v237 = vsel %vm232, %v227, %v229
    %v238 = vsel %vm232, %v229, %v231
    %247 = vrot.lane.b32.xlu0 %v169, 125
    %v248 = vpop.permute.xlu0 %247
    %249 = vrot.lane.b32.xlu0 %v170, 125
    %v250 = vpop.permute.xlu0 %249
    %251 = vrot.lane.b32.xlu0 %v171, 125
    %v252 = vpop.permute.xlu0 %251
    %253 = vrot.lane.b32.xlu0 %v172, 125
    %v254 = vpop.permute.xlu0 %253
    %255 = vrot.lane.b32.xlu0 %v173, 125
    %v256 = vpop.permute.xlu0 %255
    %257 = vrot.lane.b32.xlu0 %v174, 125
    %v258 = vpop.permute.xlu0 %257
    %259 = vrot.lane.b32.xlu0 %v175, 125
    %v260 = vpop.permute.xlu0 %259
    %261 = vrot.lane.b32.xlu0 %v176, 125
    %v262 = vpop.permute.xlu0 %261
    %vm263 = vcmask 1022976
    %v264 = vsel %vm263, %v248, %v250
    %v265 = vsel %vm263, %v250, %v252
    %v266 = vsel %vm263, %v252, %v254
    %v267 = vsel %vm263, %v256, %v258
    %v268 = vsel %vm263, %v258, %v260
    %v269 = vsel %vm263, %v260, %v262
    %278 = vrot.lane.b32.xlu0 %v169, 124
    %v279 = vpop.permute.xlu0 %278
    %280 = vrot.lane.b32.xlu0 %v170, 124
    %v281 = vpop.permute.xlu0 %280
    %282 = vrot.lane.b32.xlu0 %v171, 124
    %v283 = vpop.permute.xlu0 %282
    %284 = vrot.lane.b32.xlu0 %v172, 124
    %v285 = vpop.permute.xlu0 %284
    %286 = vrot.lane.b32.xlu0 %v173, 124
    %v287 = vpop.permute.xlu0 %286
    %288 = vrot.lane.b32.xlu0 %v174, 124
    %v289 = vpop.permute.xlu0 %288
    %290 = vrot.lane.b32.xlu0 %v175, 124
    %v291 = vpop.permute.xlu0 %290
    %292 = vrot.lane.b32.xlu0 %v176, 124
    %v293 = vpop.permute.xlu0 %292
    %vm294 = vcmask 1014784
    %v295 = vsel %vm294, %v279, %v281
    %v296 = vsel %vm294, %v281, %v283
    %v297 = vsel %vm294, %v283, %v285
    %v298 = vsel %vm294, %v287, %v289
    %v299 = vsel %vm294, %v289, %v291
    %v300 = vsel %vm294, %v291, %v293
    %v309 = vld [vmem:[%s3] sm:$0xff]
    %v310 = vld [vmem:[%s3 + $0x8] sm:$0xff]
    %v311 = vld [vmem:[%s3 + $0x10] sm:$0xff]
    %v312 = vld [vmem:[%s3 + $0x18] sm:$0xff]
    %v313 = vld [vmem:[%s4] sm:$0xff]
    %v314 = vld [vmem:[%s4 + $0x8] sm:$0xff]
    %v315 = vld [vmem:[%s4 + $0x10] sm:$0xff]
    %v316 = vld [vmem:[%s4 + $0x18] sm:$0xff]
    %318 = vset.pattern.permute.xlu0 0
    %319 = vperm.xlu0 %318, %v313
    %v320 = vpop.permute.xlu0 %319
    %323 = vset.pattern.permute.xlu0 0
    %324 = vperm.xlu0 %323, %v314
    %v325 = vpop.permute.xlu0 %324
    %328 = vset.pattern.permute.xlu0 0
    %329 = vperm.xlu0 %328, %v315
    %v330 = vpop.permute.xlu0 %329
    %333 = vset.pattern.permute.xlu0 0
    %334 = vperm.xlu0 %333, %v316
    %v335 = vpop.permute.xlu0 %334
    %vm337 = vcmask 654336
    %v339 = vsel %vm337, %v309, 0
    %v342 = vsel %vm337, %v310, 0
    %v345 = vsel %vm337, %v311, 0
    %v348 = vsel %vm337, %v312, 0
    %350 = vmatpush.msra.mxu0 0.0
    %351 = vmatpush.msra.mxu0 0.0
    %352 = vmatpush.msra.mxu0 0.0
    %353 = vmatpush.msra.mxu0 0.0
    %354 = vmatpush.msra.mxu0 0.0
    %355 = vmatpush.msra.mxu0 0.0
    %356 = vmatpush.msra.mxu0 %v298
    %357 = vmatpush.msra.mxu0 %v295
    %358 = vmatpush.msra.mxu0 %v267
    %359 = vmatpush.msra.mxu0 %v264
    %360 = vmatpush.msra.mxu0 %v236
    %361 = vmatpush.msra.mxu0 %v233
    %362 = vmatpush.msra.mxu0 %v205
    %363 = vmatpush.msra.mxu0 %v202
    %364 = vmatpush.msra.mxu0 %v173
    %365 = vmatpush.msra.mxu0 %v169
    %366 = vmatmul.f32.gmra.mxu0 %v339
    %v367 = vpop.f32.mrf.mxu0
    %v368 = vadd.f32 %v320, %v367
    %369 = vmatmul.f32.gmra.mxu0 %v342
    %v370 = vpop.f32.mrf.mxu0
    %v371 = vadd.f32 %v325, %v370
    %372 = vmatmul.f32.gmra.mxu0 %v345
    %v373 = vpop.f32.mrf.mxu0
    %v374 = vadd.f32 %v330, %v373
    %375 = vmatmul.f32.gmra.mxu0 %v348
    %v376 = vpop.f32.mrf.mxu0
    %v377 = vadd.f32 %v335, %v376
    %378 = vdwg.mxu0
    %379 = vmatpush.msra.mxu0 0.0
    %380 = vmatpush.msra.mxu0 0.0
    %381 = vmatpush.msra.mxu0 0.0
    %382 = vmatpush.msra.mxu0 0.0
    %383 = vmatpush.msra.mxu0 0.0
    %384 = vmatpush.msra.mxu0 0.0
    %385 = vmatpush.msra.mxu0 %v299
    %386 = vmatpush.msra.mxu0 %v296
    %387 = vmatpush.msra.mxu0 %v268
    %388 = vmatpush.msra.mxu0 %v265
    %389 = vmatpush.msra.mxu0 %v237
    %390 = vmatpush.msra.mxu0 %v234
    %391 = vmatpush.msra.mxu0 %v206
    %392 = vmatpush.msra.mxu0 %v203
    %393 = vmatpush.msra.mxu0 %v174
    %394 = vmatpush.msra.mxu0 %v170
    %395 = vmatmul.f32.gmra.mxu0 %v339
    %v396 = vpop.f32.mrf.mxu0
    %v397 = vadd.f32 %v320, %v396
    %398 = vmatmul.f32.gmra.mxu0 %v342
    %v399 = vpop.f32.mrf.mxu0
    %v400 = vadd.f32 %v325, %v399
    %401 = vmatmul.f32.gmra.mxu0 %v345
    %v402 = vpop.f32.mrf.mxu0
    %v403 = vadd.f32 %v330, %v402
    %404 = vmatmul.f32.gmra.mxu0 %v348
    %v405 = vpop.f32.mrf.mxu0
    %v406 = vadd.f32 %v335, %v405
    %407 = vdwg.mxu0
    %408 = vmatpush.msra.mxu0 0.0
    %409 = vmatpush.msra.mxu0 0.0
    %410 = vmatpush.msra.mxu0 0.0
    %411 = vmatpush.msra.mxu0 0.0
    %412 = vmatpush.msra.mxu0 0.0
    %413 = vmatpush.msra.mxu0 0.0
    %414 = vmatpush.msra.mxu0 %v300
    %415 = vmatpush.msra.mxu0 %v297
    %416 = vmatpush.msra.mxu0 %v269
    %417 = vmatpush.msra.mxu0 %v266
    %418 = vmatpush.msra.mxu0 %v238
    %419 = vmatpush.msra.mxu0 %v235
    %420 = vmatpush.msra.mxu0 %v207
    %421 = vmatpush.msra.mxu0 %v204
    %422 = vmatpush.msra.mxu0 %v175
    %423 = vmatpush.msra.mxu0 %v171
    %424 = vmatmul.f32.gmra.mxu0 %v339
    %v425 = vpop.f32.mrf.mxu0
    %v426 = vadd.f32 %v320, %v425
    %427 = vmatmul.f32.gmra.mxu0 %v342
    %v428 = vpop.f32.mrf.mxu0
    %v429 = vadd.f32 %v325, %v428
    %430 = vmatmul.f32.gmra.mxu0 %v345
    %v431 = vpop.f32.mrf.mxu0
    %v432 = vadd.f32 %v330, %v431
    %433 = vmatmul.f32.gmra.mxu0 %v348
    %v434 = vpop.f32.mrf.mxu0
    %v435 = vadd.f32 %v335, %v434
    %436 = vdwg.mxu0
    %437 = vmatpush.msra.mxu0 0.0
    %438 = vmatpush.msra.mxu0 0.0
    %439 = vmatpush.msra.mxu0 0.0
    %440 = vmatpush.msra.mxu0 0.0
    %441 = vmatpush.msra.mxu0 0.0
    %442 = vmatpush.msra.mxu0 0.0
    %443 = vmatpush.msra.mxu0 %v293
    %444 = vmatpush.msra.mxu0 %v285
    %445 = vmatpush.msra.mxu0 %v262
    %446 = vmatpush.msra.mxu0 %v254
    %447 = vmatpush.msra.mxu0 %v231
    %448 = vmatpush.msra.mxu0 %v223
    %449 = vmatpush.msra.mxu0 %v200
    %450 = vmatpush.msra.mxu0 %v192
    %451 = vmatpush.msra.mxu0 %v176
    %452 = vmatpush.msra.mxu0 %v172
    %453 = vmatmul.f32.gmra.mxu0 %v339
    %v454 = vpop.f32.mrf.mxu0
    %v455 = vadd.f32 %v320, %v454
    %456 = vmatmul.f32.gmra.mxu0 %v342
    %v457 = vpop.f32.mrf.mxu0
    %v458 = vadd.f32 %v325, %v457
    %459 = vmatmul.f32.gmra.mxu0 %v345
    %v460 = vpop.f32.mrf.mxu0
    %v461 = vadd.f32 %v330, %v460
    %462 = vmatmul.f32.gmra.mxu0 %v348
    %v463 = vpop.f32.mrf.mxu0
    %v464 = vadd.f32 %v335, %v463
    %465 = vdwg.mxu0
    %v466 = vmax.f32 %v368, 0.0
    %v467 = vmax.f32 %v397, 0.0
    %v468 = vmax.f32 %v426, 0.0
    %v469 = vmax.f32 %v455, 0.0
    %v470 = vmax.f32 %v371, 0.0
    %v471 = vmax.f32 %v400, 0.0
    %v472 = vmax.f32 %v429, 0.0
    %v473 = vmax.f32 %v458, 0.0
    %v474 = vmax.f32 %v374, 0.0
    %v475 = vmax.f32 %v403, 0.0
    %v476 = vmax.f32 %v432, 0.0
    %v477 = vmax.f32 %v461, 0.0
    %v478 = vmax.f32 %v377, 0.0
    %v479 = vmax.f32 %v406, 0.0
    %v480 = vmax.f32 %v435, 0.0
    %v481 = vmax.f32 %v464, 0.0
    %498 = vrot.lane.b32.xlu0 %v466, 127
    %v499 = vpop.permute.xlu0 %498
    %500 = vrot.lane.b32.xlu0 %v467, 127
    %v501 = vpop.permute.xlu0 %500
    %502 = vrot.lane.b32.xlu0 %v468, 127
    %v503 = vpop.permute.xlu0 %502
    %504 = vrot.lane.b32.xlu0 %v469, 127
    %v505 = vpop.permute.xlu0 %504
    %506 = vrot.lane.b32.xlu0 %v470, 127
    %v507 = vpop.permute.xlu0 %506
    %508 = vrot.lane.b32.xlu0 %v471, 127
    %v509 = vpop.permute.xlu0 %508
    %510 = vrot.lane.b32.xlu0 %v472, 127
    %v511 = vpop.permute.xlu0 %510
    %512 = vrot.lane.b32.xlu0 %v473, 127
    %v513 = vpop.permute.xlu0 %512
    %514 = vrot.lane.b32.xlu0 %v474, 127
    %v515 = vpop.permute.xlu0 %514
    %516 = vrot.lane.b32.xlu0 %v475, 127
    %v517 = vpop.permute.xlu0 %516
    %518 = vrot.lane.b32.xlu0 %v476, 127
    %v519 = vpop.permute.xlu0 %518
    %520 = vrot.lane.b32.xlu0 %v477, 127
    %v521 = vpop.permute.xlu0 %520
    %522 = vrot.lane.b32.xlu0 %v478, 127
    %v523 = vpop.permute.xlu0 %522
    %524 = vrot.lane.b32.xlu0 %v479, 127
    %v525 = vpop.permute.xlu0 %524
    %526 = vrot.lane.b32.xlu0 %v480, 127
    %v527 = vpop.permute.xlu0 %526
    %528 = vrot.lane.b32.xlu0 %v481, 127
    %v529 = vpop.permute.xlu0 %528
    %v530 = vsel %vm201, %v499, %v501
    %v531 = vsel %vm201, %v501, %v503
    %v532 = vsel %vm201, %v503, %v505
    %v533 = vsel %vm201, %v507, %v509
    %v534 = vsel %vm201, %v509, %v511
    %v535 = vsel %vm201, %v511, %v513
    %v536 = vsel %vm201, %v515, %v517
    %v537 = vsel %vm201, %v517, %v519
    %v538 = vsel %vm201, %v519, %v521
    %v539 = vsel %vm201, %v523, %v525
    %v540 = vsel %vm201, %v525, %v527
    %v541 = vsel %vm201, %v527, %v529
    %v558 = vmax.f32 %v466, %v530
    %v559 = vmax.f32 %v467, %v531
    %v560 = vmax.f32 %v468, %v532
    %v561 = vmax.f32 %v469, %v505
    %v562 = vmax.f32 %v470, %v533
    %v563 = vmax.f32 %v471, %v534
    %v564 = vmax.f32 %v472, %v535
    %v565 = vmax.f32 %v473, %v513
    %v566 = vmax.f32 %v474, %v536
    %v567 = vmax.f32 %v475, %v537
    %v568 = vmax.f32 %v476, %v538
    %v569 = vmax.f32 %v477, %v521
    %v570 = vmax.f32 %v478, %v539
    %v571 = vmax.f32 %v479, %v540
    %v572 = vmax.f32 %v480, %v541
    %v573 = vmax.f32 %v481, %v529
    %590 = vrot.lane.b32.xlu0 %v558, 126
    %v591 = vpop.permute.xlu0 %590
    %592 = vrot.lane.b32.xlu0 %v559, 126
    %v593 = vpop.permute.xlu0 %592
    %594 = vrot.lane.b32.xlu0 %v560, 126
    %v595 = vpop.permute.xlu0 %594
    %596 = vrot.lane.b32.xlu0 %v561, 126
    %v597 = vpop.permute.xlu0 %596
    %598 = vrot.lane.b32.xlu0 %v562, 126
    %v599 = vpop.permute.xlu0 %598
    %600 = vrot.lane.b32.xlu0 %v563, 126
    %v601 = vpop.permute.xlu0 %600
    %602 = vrot.lane.b32.xlu0 %v564, 126
    %v603 = vpop.permute.xlu0 %602
    %604 = vrot.lane.b32.xlu0 %v565, 126
    %v605 = vpop.permute.xlu0 %604
    %606 = vrot.lane.b32.xlu0 %v566, 126
    %v607 = vpop.permute.xlu0 %606
    %608 = vrot.lane.b32.xlu0 %v567, 126
    %v609 = vpop.permute.xlu0 %608
    %610 = vrot.lane.b32.xlu0 %v568, 126
    %v611 = vpop.permute.xlu0 %610
    %612 = vrot.lane.b32.xlu0 %v569, 126
    %v613 = vpop.permute.xlu0 %612
    %614 = vrot.lane.b32.xlu0 %v570, 126
    %v615 = vpop.permute.xlu0 %614
    %616 = vrot.lane.b32.xlu0 %v571, 126
    %v617 = vpop.permute.xlu0 %616
    %618 = vrot.lane.b32.xlu0 %v572, 126
    %v619 = vpop.permute.xlu0 %618
    %620 = vrot.lane.b32.xlu0 %v573, 126
    %v621 = vpop.permute.xlu0 %620
    %v622 = vsel %vm232, %v591, %v593
    %v623 = vsel %vm232, %v593, %v595
    %v624 = vsel %vm232, %v595, %v597
    %v625 = vsel %vm232, %v599, %v601
    %v626 = vsel %vm232, %v601, %v603
    %v627 = vsel %vm232, %v603, %v605
    %v628 = vsel %vm232, %v607, %v609
    %v629 = vsel %vm232, %v609, %v611
    %v630 = vsel %vm232, %v611, %v613
    %v631 = vsel %vm232, %v615, %v617
    %v632 = vsel %vm232, %v617, %v619
    %v633 = vsel %vm232, %v619, %v621
    %v650 = vmax.f32 %v558, %v622
    %v651 = vmax.f32 %v559, %v623
    %v652 = vmax.f32 %v560, %v624
    %v653 = vmax.f32 %v561, %v597
    %v654 = vmax.f32 %v562, %v625
    %v655 = vmax.f32 %v563, %v626
    %v656 = vmax.f32 %v564, %v627
    %v657 = vmax.f32 %v565, %v605
    %v658 = vmax.f32 %v566, %v628
    %v659 = vmax.f32 %v567, %v629
    %v660 = vmax.f32 %v568, %v630
    %v661 = vmax.f32 %v569, %v613
    %v662 = vmax.f32 %v570, %v631
    %v663 = vmax.f32 %v571, %v632
    %v664 = vmax.f32 %v572, %v633
    %v665 = vmax.f32 %v573, %v621
    %682 = vrot.lane.b32.xlu0 %v650, 125
    %v683 = vpop.permute.xlu0 %682
    %684 = vrot.lane.b32.xlu0 %v651, 125
    %v685 = vpop.permute.xlu0 %684
    %686 = vrot.lane.b32.xlu0 %v652, 125
    %v687 = vpop.permute.xlu0 %686
    %688 = vrot.lane.b32.xlu0 %v653, 125
    %v689 = vpop.permute.xlu0 %688
    %690 = vrot.lane.b32.xlu0 %v654, 125
    %v691 = vpop.permute.xlu0 %690
    %692 = vrot.lane.b32.xlu0 %v655, 125
    %v693 = vpop.permute.xlu0 %692
    %694 = vrot.lane.b32.xlu0 %v656, 125
    %v695 = vpop.permute.xlu0 %694
    %696 = vrot.lane.b32.xlu0 %v657, 125
    %v697 = vpop.permute.xlu0 %696
    %698 = vrot.lane.b32.xlu0 %v658, 125
    %v699 = vpop.permute.xlu0 %698
    %700 = vrot.lane.b32.xlu0 %v659, 125
    %v701 = vpop.permute.xlu0 %700
    %702 = vrot.lane.b32.xlu0 %v660, 125
    %v703 = vpop.permute.xlu0 %702
    %704 = vrot.lane.b32.xlu0 %v661, 125
    %v705 = vpop.permute.xlu0 %704
    %706 = vrot.lane.b32.xlu0 %v662, 125
    %v707 = vpop.permute.xlu0 %706
    %708 = vrot.lane.b32.xlu0 %v663, 125
    %v709 = vpop.permute.xlu0 %708
    %710 = vrot.lane.b32.xlu0 %v664, 125
    %v711 = vpop.permute.xlu0 %710
    %712 = vrot.lane.b32.xlu0 %v665, 125
    %v713 = vpop.permute.xlu0 %712
    %v714 = vsel %vm263, %v683, %v685
    %v715 = vsel %vm263, %v685, %v687
    %v716 = vsel %vm263, %v687, %v689
    %v717 = vsel %vm263, %v691, %v693
    %v718 = vsel %vm263, %v693, %v695
    %v719 = vsel %vm263, %v695, %v697
    %v720 = vsel %vm263, %v699, %v701
    %v721 = vsel %vm263, %v701, %v703
    %v722 = vsel %vm263, %v703, %v705
    %v723 = vsel %vm263, %v707, %v709
    %v724 = vsel %vm263, %v709, %v711
    %v725 = vsel %vm263, %v711, %v713
    %v742 = vmax.f32 %v650, %v714
    %v743 = vmax.f32 %v651, %v715
    %v744 = vmax.f32 %v652, %v716
    %v745 = vmax.f32 %v653, %v689
    %v746 = vmax.f32 %v654, %v717
    %v747 = vmax.f32 %v655, %v718
    %v748 = vmax.f32 %v656, %v719
    %v749 = vmax.f32 %v657, %v697
    %v750 = vmax.f32 %v658, %v720
    %v751 = vmax.f32 %v659, %v721
    %v752 = vmax.f32 %v660, %v722
    %v753 = vmax.f32 %v661, %v705
    %v754 = vmax.f32 %v662, %v723
    %v755 = vmax.f32 %v663, %v724
    %v756 = vmax.f32 %v664, %v725
    %v757 = vmax.f32 %v665, %v713
    %774 = vrot.lane.b32.xlu0 %v742, 122
    %v775 = vpop.permute.xlu0 %774
    %776 = vrot.lane.b32.xlu0 %v743, 122
    %v777 = vpop.permute.xlu0 %776
    %778 = vrot.lane.b32.xlu0 %v744, 122
    %v779 = vpop.permute.xlu0 %778
    %780 = vrot.lane.b32.xlu0 %v745, 122
    %v781 = vpop.permute.xlu0 %780
    %782 = vrot.lane.b32.xlu0 %v746, 122
    %v783 = vpop.permute.xlu0 %782
    %784 = vrot.lane.b32.xlu0 %v747, 122
    %v785 = vpop.permute.xlu0 %784
    %786 = vrot.lane.b32.xlu0 %v748, 122
    %v787 = vpop.permute.xlu0 %786
    %788 = vrot.lane.b32.xlu0 %v749, 122
    %v789 = vpop.permute.xlu0 %788
    %790 = vrot.lane.b32.xlu0 %v750, 122
    %v791 = vpop.permute.xlu0 %790
    %792 = vrot.lane.b32.xlu0 %v751, 122
    %v793 = vpop.permute.xlu0 %792
    %794 = vrot.lane.b32.xlu0 %v752, 122
    %v795 = vpop.permute.xlu0 %794
    %796 = vrot.lane.b32.xlu0 %v753, 122
    %v797 = vpop.permute.xlu0 %796
    %798 = vrot.lane.b32.xlu0 %v754, 122
    %v799 = vpop.permute.xlu0 %798
    %800 = vrot.lane.b32.xlu0 %v755, 122
    %v801 = vpop.permute.xlu0 %800
    %802 = vrot.lane.b32.xlu0 %v756, 122
    %v803 = vpop.permute.xlu0 %802
    %804 = vrot.lane.b32.xlu0 %v757, 122
    %v805 = vpop.permute.xlu0 %804
    %vm806 = vcmask 998400
    %v807 = vsel %vm806, %v775, %v777
    %v808 = vsel %vm806, %v777, %v779
    %v809 = vsel %vm806, %v779, %v781
    %v810 = vsel %vm806, %v783, %v785
    %v811 = vsel %vm806, %v785, %v787
    %v812 = vsel %vm806, %v787, %v789
    %v813 = vsel %vm806, %v791, %v793
    %v814 = vsel %vm806, %v793, %v795
    %v815 = vsel %vm806, %v795, %v797
    %v816 = vsel %vm806, %v799, %v801
    %v817 = vsel %vm806, %v801, %v803
    %v818 = vsel %vm806, %v803, %v805
    %835 = vrot.lane.b32.xlu0 %v742, 116
    %v836 = vpop.permute.xlu0 %835
    %837 = vrot.lane.b32.xlu0 %v743, 116
    %v838 = vpop.permute.xlu0 %837
    %839 = vrot.lane.b32.xlu0 %v744, 116
    %v840 = vpop.permute.xlu0 %839
    %841 = vrot.lane.b32.xlu0 %v745, 116
    %v842 = vpop.permute.xlu0 %841
    %843 = vrot.lane.b32.xlu0 %v746, 116
    %v844 = vpop.permute.xlu0 %843
    %845 = vrot.lane.b32.xlu0 %v747, 116
    %v846 = vpop.permute.xlu0 %845
    %847 = vrot.lane.b32.xlu0 %v748, 116
    %v848 = vpop.permute.xlu0 %847
    %849 = vrot.lane.b32.xlu0 %v749, 116
    %v850 = vpop.permute.xlu0 %849
    %851 = vrot.lane.b32.xlu0 %v750, 116
    %v852 = vpop.permute.xlu0 %851
    %853 = vrot.lane.b32.xlu0 %v751, 116
    %v854 = vpop.permute.xlu0 %853
    %855 = vrot.lane.b32.xlu0 %v752, 116
    %v856 = vpop.permute.xlu0 %855
    %857 = vrot.lane.b32.xlu0 %v753, 116
    %v858 = vpop.permute.xlu0 %857
    %859 = vrot.lane.b32.xlu0 %v754, 116
    %v860 = vpop.permute.xlu0 %859
    %861 = vrot.lane.b32.xlu0 %v755, 116
    %v862 = vpop.permute.xlu0 %861
    %863 = vrot.lane.b32.xlu0 %v756, 116
    %v864 = vpop.permute.xlu0 %863
    %865 = vrot.lane.b32.xlu0 %v757, 116
    %v866 = vpop.permute.xlu0 %865
    %vm867 = vcmask 949248
    %v868 = vsel %vm867, %v836, %v838
    %v869 = vsel %vm867, %v838, %v840
    %v870 = vsel %vm867, %v840, %v842
    %v871 = vsel %vm867, %v844, %v846
    %v872 = vsel %vm867, %v846, %v848
    %v873 = vsel %vm867, %v848, %v850
    %v874 = vsel %vm867, %v852, %v854
    %v875 = vsel %vm867, %v854, %v856
    %v876 = vsel %vm867, %v856, %v858
    %v877 = vsel %vm867, %v860, %v862
    %v878 = vsel %vm867, %v862, %v864
    %v879 = vsel %vm867, %v864, %v866
    %896 = vrot.lane.b32.xlu0 %v742, 110
    %v897 = vpop.permute.xlu0 %896
    %898 = vrot.lane.b32.xlu0 %v743, 110
    %v899 = vpop.permute.xlu0 %898
    %900 = vrot.lane.b32.xlu0 %v744, 110
    %v901 = vpop.permute.xlu0 %900
    %902 = vrot.lane.b32.xlu0 %v745, 110
    %v903 = vpop.permute.xlu0 %902
    %904 = vrot.lane.b32.xlu0 %v746, 110
    %v905 = vpop.permute.xlu0 %904
    %906 = vrot.lane.b32.xlu0 %v747, 110
    %v907 = vpop.permute.xlu0 %906
    %908 = vrot.lane.b32.xlu0 %v748, 110
    %v909 = vpop.permute.xlu0 %908
    %910 = vrot.lane.b32.xlu0 %v749, 110
    %v911 = vpop.permute.xlu0 %910
    %912 = vrot.lane.b32.xlu0 %v750, 110
    %v913 = vpop.permute.xlu0 %912
    %914 = vrot.lane.b32.xlu0 %v751, 110
    %v915 = vpop.permute.xlu0 %914
    %916 = vrot.lane.b32.xlu0 %v752, 110
    %v917 = vpop.permute.xlu0 %916
    %918 = vrot.lane.b32.xlu0 %v753, 110
    %v919 = vpop.permute.xlu0 %918
    %920 = vrot.lane.b32.xlu0 %v754, 110
    %v921 = vpop.permute.xlu0 %920
    %922 = vrot.lane.b32.xlu0 %v755, 110
    %v923 = vpop.permute.xlu0 %922
    %924 = vrot.lane.b32.xlu0 %v756, 110
    %v925 = vpop.permute.xlu0 %924
    %926 = vrot.lane.b32.xlu0 %v757, 110
    %v927 = vpop.permute.xlu0 %926
    %vm928 = vcmask 900096
    %v929 = vsel %vm928, %v897, %v899
    %v930 = vsel %vm928, %v899, %v901
    %v931 = vsel %vm928, %v901, %v903
    %v932 = vsel %vm928, %v905, %v907
    %v933 = vsel %vm928, %v907, %v909
    %v934 = vsel %vm928, %v909, %v911
    %v935 = vsel %vm928, %v913, %v915
    %v936 = vsel %vm928, %v915, %v917
    %v937 = vsel %vm928, %v917, %v919
    %v938 = vsel %vm928, %v921, %v923
    %v939 = vsel %vm928, %v923, %v925
    %v940 = vsel %vm928, %v925, %v927
    %957 = vrot.lane.b32.xlu0 %v742, 104
    %v958 = vpop.permute.xlu0 %957
    %959 = vrot.lane.b32.xlu0 %v743, 104
    %v960 = vpop.permute.xlu0 %959
    %961 = vrot.lane.b32.xlu0 %v744, 104
    %v962 = vpop.permute.xlu0 %961
    %963 = vrot.lane.b32.xlu0 %v745, 104
    %v964 = vpop.permute.xlu0 %963
    %965 = vrot.lane.b32.xlu0 %v746, 104
    %v966 = vpop.permute.xlu0 %965
    %967 = vrot.lane.b32.xlu0 %v747, 104
    %v968 = vpop.permute.xlu0 %967
    %969 = vrot.lane.b32.xlu0 %v748, 104
    %v970 = vpop.permute.xlu0 %969
    %971 = vrot.lane.b32.xlu0 %v749, 104
    %v972 = vpop.permute.xlu0 %971
    %973 = vrot.lane.b32.xlu0 %v750, 104
    %v974 = vpop.permute.xlu0 %973
    %975 = vrot.lane.b32.xlu0 %v751, 104
    %v976 = vpop.permute.xlu0 %975
    %977 = vrot.lane.b32.xlu0 %v752, 104
    %v978 = vpop.permute.xlu0 %977
    %979 = vrot.lane.b32.xlu0 %v753, 104
    %v980 = vpop.permute.xlu0 %979
    %981 = vrot.lane.b32.xlu0 %v754, 104
    %v982 = vpop.permute.xlu0 %981
    %983 = vrot.lane.b32.xlu0 %v755, 104
    %v984 = vpop.permute.xlu0 %983
    %985 = vrot.lane.b32.xlu0 %v756, 104
    %v986 = vpop.permute.xlu0 %985
    %987 = vrot.lane.b32.xlu0 %v757, 104
    %v988 = vpop.permute.xlu0 %987
    %vm989 = vcmask 850944
    %v990 = vsel %vm989, %v958, %v960
    %v991 = vsel %vm989, %v960, %v962
    %v992 = vsel %vm989, %v962, %v964
    %v993 = vsel %vm989, %v966, %v968
    %v994 = vsel %vm989, %v968, %v970
    %v995 = vsel %vm989, %v970, %v972
    %v996 = vsel %vm989, %v974, %v976
    %v997 = vsel %vm989, %v976, %v978
    %v998 = vsel %vm989, %v978, %v980
    %v999 = vsel %vm989, %v982, %v984
    %v1000 = vsel %vm989, %v984, %v986
    %v1001 = vsel %vm989, %v986, %v988
    %v1018 = vld [vmem:[%s5] sm:$0xff]
    %v1019 = vld [vmem:[%s6] sm:$0xf]
    %1021 = vset.pattern.permute.xlu0 0
    %1022 = vperm.xlu0 %1021, %v1019
    %v1023 = vpop.permute.xlu0 %1022
    %1026 = vst [vmem:[#allocation1] ss:$2 sm:$0xff] %v1018
    %v1027 = vld.sshfl [vmem:[#allocation1] sm:$0xff pattern:$0x75316420]
    %v1028 = vld.sshfl [vmem:[#allocation1 + $0x8] sm:$0xff pattern:$0x75316420]
    %vm1030 = vcmask 261120
    %v1031 = vsel %vm1030, %v1028, 0
    %1033 = vmatpush.msra.mxu0 %v938
    %1034 = vmatpush.msra.mxu0 %v935
    %1035 = vmatpush.msra.mxu0 %v932
    %1036 = vmatpush.msra.mxu0 %v929
    %1037 = vmatpush.msra.mxu0 %v877
    %1038 = vmatpush.msra.mxu0 %v874
    %1039 = vmatpush.msra.mxu0 %v871
    %1040 = vmatpush.msra.mxu0 %v868
    %1041 = vmatpush.msra.mxu0 %v816
    %1042 = vmatpush.msra.mxu0 %v813
    %1043 = vmatpush.msra.mxu0 %v810
    %1044 = vmatpush.msra.mxu0 %v807
    %1045 = vmatpush.msra.mxu0 %v754
    %1046 = vmatpush.msra.mxu0 %v750
    %1047 = vmatpush.msra.mxu0 %v746
    %1048 = vmatpush.msra.mxu0 %v742
    %1049 = vmatmul.f32.gmra.mxu0 %v1027
    %v1050 = vpop.f32.mrf.mxu0
    %v1051 = vadd.f32 %v1023, %v1050
    %1052 = vdwg.mxu0
    %1053 = vmatpush.msra.mxu0 0.0
    %1054 = vmatpush.msra.mxu0 0.0
    %1055 = vmatpush.msra.mxu0 0.0
    %1056 = vmatpush.msra.mxu0 0.0
    %1057 = vmatpush.msra.mxu0 0.0
    %1058 = vmatpush.msra.mxu0 0.0
    %1059 = vmatpush.msra.mxu0 0.0
    %1060 = vmatpush.msra.mxu0 0.0
    %1061 = vmatpush.msra.mxu0 0.0
    %1062 = vmatpush.msra.mxu0 0.0
    %1063 = vmatpush.msra.mxu0 0.0
    %1064 = vmatpush.msra.mxu0 0.0
    %1065 = vmatpush.msra.mxu0 %v999
    %1066 = vmatpush.msra.mxu0 %v996
    %1067 = vmatpush.msra.mxu0 %v993
    %1068 = vmatpush.msra.mxu0 %v990
    %1069 = vmatmul.f32.gmra.mxu0 %v1031
    %v1070 = vpop.f32.mrf.mxu0
    %v1071 = vadd.f32 %v1051, %v1070
    %1072 = vdwg.mxu0
    %1073 = vmatpush.msra.mxu0 %v939
    %1074 = vmatpush.msra.mxu0 %v936
    %1075 = vmatpush.msra.mxu0 %v933
    %1076 = vmatpush.msra.mxu0 %v930
    %1077 = vmatpush.msra.mxu0 %v878
    %1078 = vmatpush.msra.mxu0 %v875
    %1079 = vmatpush.msra.mxu0 %v872
    %1080 = vmatpush.msra.mxu0 %v869
    %1081 = vmatpush.msra.mxu0 %v817
    %1082 = vmatpush.msra.mxu0 %v814
    %1083 = vmatpush.msra.mxu0 %v811
    %1084 = vmatpush.msra.mxu0 %v808
    %1085 = vmatpush.msra.mxu0 %v755
    %1086 = vmatpush.msra.mxu0 %v751
    %1087 = vmatpush.msra.mxu0 %v747
    %1088 = vmatpush.msra.mxu0 %v743
    %1089 = vmatmul.f32.gmra.mxu0 %v1027
    %v1090 = vpop.f32.mrf.mxu0
    %v1091 = vadd.f32 %v1023, %v1090
    %1092 = vdwg.mxu0
    %1093 = vmatpush.msra.mxu0 0.0
    %1094 = vmatpush.msra.mxu0 0.0
    %1095 = vmatpush.msra.mxu0 0.0
    %1096 = vmatpush.msra.mxu0 0.0
    %1097 = vmatpush.msra.mxu0 0.0
    %1098 = vmatpush.msra.mxu0 0.0
    %1099 = vmatpush.msra.mxu0 0.0
    %1100 = vmatpush.msra.mxu0 0.0
    %1101 = vmatpush.msra.mxu0 0.0
    %1102 = vmatpush.msra.mxu0 0.0
    %1103 = vmatpush.msra.mxu0 0.0
    %1104 = vmatpush.msra.mxu0 0.0
    %1105 = vmatpush.msra.mxu0 %v1000
    %1106 = vmatpush.msra.mxu0 %v997
    %1107 = vmatpush.msra.mxu0 %v994
    %1108 = vmatpush.msra.mxu0 %v991
    %1109 = vmatmul.f32.gmra.mxu0 %v1031
    %v1110 = vpop.f32.mrf.mxu0
    %v1111 = vadd.f32 %v1091, %v1110
    %1112 = vdwg.mxu0
    %1113 = vmatpush.msra.mxu0 %v940
    %1114 = vmatpush.msra.mxu0 %v937
    %1115 = vmatpush.msra.mxu0 %v934
    %1116 = vmatpush.msra.mxu0 %v931
    %1117 = vmatpush.msra.mxu0 %v879
    %1118 = vmatpush.msra.mxu0 %v876
    %1119 = vmatpush.msra.mxu0 %v873
    %1120 = vmatpush.msra.mxu0 %v870
    %1121 = vmatpush.msra.mxu0 %v818
    %1122 = vmatpush.msra.mxu0 %v815
    %1123 = vmatpush.msra.mxu0 %v812
    %1124 = vmatpush.msra.mxu0 %v809
    %1125 = vmatpush.msra.mxu0 %v756
    %1126 = vmatpush.msra.mxu0 %v752
    %1127 = vmatpush.msra.mxu0 %v748
    %1128 = vmatpush.msra.mxu0 %v744
    %1129 = vmatmul.f32.gmra.mxu0 %v1027
    %v1130 = vpop.f32.mrf.mxu0
    %v1131 = vadd.f32 %v1023, %v1130
    %1132 = vdwg.mxu0
    %1133 = vmatpush.msra.mxu0 0.0
    %1134 = vmatpush.msra.mxu0 0.0
    %1135 = vmatpush.msra.mxu0 0.0
    %1136 = vmatpush.msra.mxu0 0.0
    %1137 = vmatpush.msra.mxu0 0.0
    %1138 = vmatpush.msra.mxu0 0.0
    %1139 = vmatpush.msra.mxu0 0.0
    %1140 = vmatpush.msra.mxu0 0.0
    %1141 = vmatpush.msra.mxu0 0.0
    %1142 = vmatpush.msra.mxu0 0.0
    %1143 = vmatpush.msra.mxu0 0.0
    %1144 = vmatpush.msra.mxu0 0.0
    %1145 = vmatpush.msra.mxu0 %v1001
    %1146 = vmatpush.msra.mxu0 %v998
    %1147 = vmatpush.msra.mxu0 %v995
    %1148 = vmatpush.msra.mxu0 %v992
    %1149 = vmatmul.f32.gmra.mxu0 %v1031
    %v1150 = vpop.f32.mrf.mxu0
    %v1151 = vadd.f32 %v1131, %v1150
    %1152 = vdwg.mxu0
    %1153 = vmatpush.msra.mxu0 %v927
    %1154 = vmatpush.msra.mxu0 %v919
    %1155 = vmatpush.msra.mxu0 %v911
    %1156 = vmatpush.msra.mxu0 %v903
    %1157 = vmatpush.msra.mxu0 %v866
    %1158 = vmatpush.msra.mxu0 %v858
    %1159 = vmatpush.msra.mxu0 %v850
    %1160 = vmatpush.msra.mxu0 %v842
    %1161 = vmatpush.msra.mxu0 %v805
    %1162 = vmatpush.msra.mxu0 %v797
    %1163 = vmatpush.msra.mxu0 %v789
    %1164 = vmatpush.msra.mxu0 %v781
    %1165 = vmatpush.msra.mxu0 %v757
    %1166 = vmatpush.msra.mxu0 %v753
    %1167 = vmatpush.msra.mxu0 %v749
    %1168 = vmatpush.msra.mxu0 %v745
    %1169 = vmatmul.f32.gmra.mxu0 %v1027
    %v1170 = vpop.f32.mrf.mxu0
    %v1171 = vadd.f32 %v1023, %v1170
    %1172 = vdwg.mxu0
    %1173 = vmatpush.msra.mxu0 0.0
    %1174 = vmatpush.msra.mxu0 0.0
    %1175 = vmatpush.msra.mxu0 0.0
    %1176 = vmatpush.msra.mxu0 0.0
    %1177 = vmatpush.msra.mxu0 0.0
    %1178 = vmatpush.msra.mxu0 0.0
    %1179 = vmatpush.msra.mxu0 0.0
    %1180 = vmatpush.msra.mxu0 0.0
    %1181 = vmatpush.msra.mxu0 0.0
    %1182 = vmatpush.msra.mxu0 0.0
    %1183 = vmatpush.msra.mxu0 0.0
    %1184 = vmatpush.msra.mxu0 0.0
    %1185 = vmatpush.msra.mxu0 %v988
    %1186 = vmatpush.msra.mxu0 %v980
    %1187 = vmatpush.msra.mxu0 %v972
    %1188 = vmatpush.msra.mxu0 %v964
    %1189 = vmatmul.f32.gmra.mxu0 %v1031
    %v1190 = vpop.f32.mrf.mxu0
    %v1191 = vadd.f32 %v1171, %v1190
    %1192 = vdwg.mxu0
    %v1193 = vmax.f32 %v1071, 0.0
    %v1194 = vmax.f32 %v1111, 0.0
    %v1195 = vmax.f32 %v1151, 0.0
    %v1196 = vmax.f32 %v1191, 0.0
    %v1197 = vld [vmem:[%s7] sm:$0xff]
    %v1198 = vld [vmem:[%s7 + $0x8] sm:$0xff]
    %v1199 = vld [vmem:[%s7 + $0x10] sm:$0xff]
    %v1200 = vld [vmem:[%s7 + $0x18] sm:$0xff]
    %v1201 = vld [vmem:[%s7 + $0x20] sm:$0xff]
    %v1202 = vld [vmem:[%s7 + $0x28] sm:$0xff]
    %v1203 = vld [vmem:[%s7 + $0x30] sm:$0xff]
    %v1204 = vld [vmem:[%s7 + $0x38] sm:$0xff]
    %v1205 = vld [vmem:[%s7 + $0x40] sm:$0xff]
    %v1206 = vld [vmem:[%s7 + $0x48] sm:$0xff]
    %v1207 = vld [vmem:[%s7 + $0x50] sm:$0xff]
    %v1208 = vld [vmem:[%s7 + $0x58] sm:$0xff]
    %v1209 = vld [vmem:[%s7 + $0x60] sm:$0xff]
    %v1210 = vld [vmem:[%s7 + $0x68] sm:$0xff]
    %v1211 = vld [vmem:[%s7 + $0x70] sm:$0xff]
    %v1212 = vld [vmem:[%s7 + $0x78] sm:$0xff]
    %v1213 = vld [vmem:[%s7 + $0x80] sm:$0xff]
    %v1214 = vld [vmem:[%s7 + $0x88] sm:$0xff]
    %v1215 = vld [vmem:[%s7 + $0x90] sm:$0xff]
    %v1216 = vld [vmem:[%s7 + $0x98] sm:$0xff]
    %v1217 = vld [vmem:[%s7 + $0xa0] sm:$0xff]
    %v1218 = vld [vmem:[%s7 + $0xa8] sm:$0xff]
    %v1219 = vld [vmem:[%s7 + $0xb0] sm:$0xff]
    %v1220 = vld [vmem:[%s7 + $0xb8] sm:$0xff]
    %v1221 = vld [vmem:[%s7 + $0xc0] sm:$0xff]
    %v1222 = vld [vmem:[%s7 + $0xc8] sm:$0xff]
    %v1223 = vld [vmem:[%s7 + $0xd0] sm:$0xff]
    %v1224 = vld [vmem:[%s7 + $0xd8] sm:$0xff]
    %v1225 = vld [vmem:[%s7 + $0xe0] sm:$0xff]
    %v1226 = vld [vmem:[%s7 + $0xe8] sm:$0xff]
    %v1227 = vld [vmem:[%s7 + $0xf0] sm:$0xff]
    %v1228 = vld [vmem:[%s7 + $0xf8] sm:$0xff]
    %v1229 = vld [vmem:[%s7 + $0x100] sm:$0xff]
    %v1230 = vld [vmem:[%s7 + $0x108] sm:$0xff]
    %v1231 = vld [vmem:[%s7 + $0x110] sm:$0xff]
    %v1232 = vld [vmem:[%s7 + $0x118] sm:$0xff]
    %v1233 = vld [vmem:[%s7 + $0x120] sm:$0xff]
    %v1234 = vld [vmem:[%s7 + $0x128] sm:$0xff]
    %v1235 = vld [vmem:[%s7 + $0x130] sm:$0xff]
    %v1236 = vld [vmem:[%s7 + $0x138] sm:$0xff]
    %v1237 = vld [vmem:[%s7 + $0x140] sm:$0xff]
    %v1238 = vld [vmem:[%s7 + $0x148] sm:$0xff]
    %v1239 = vld [vmem:[%s7 + $0x150] sm:$0xff]
    %v1240 = vld [vmem:[%s7 + $0x158] sm:$0xff]
    %v1241 = vld [vmem:[%s7 + $0x160] sm:$0xff]
    %v1242 = vld [vmem:[%s7 + $0x168] sm:$0xff]
    %v1243 = vld [vmem:[%s7 + $0x170] sm:$0xff]
    %v1244 = vld [vmem:[%s7 + $0x178] sm:$0xff]
    %v1245 = vld [vmem:[%s7 + $0x180] sm:$0xff]
    %v1246 = vld [vmem:[%s7 + $0x188] sm:$0xff]
    %v1247 = vld [vmem:[%s7 + $0x190] sm:$0xff]
    %v1248 = vld [vmem:[%s7 + $0x198] sm:$0xff]
    %v1249 = vld [vmem:[%s7 + $0x1a0] sm:$0xff]
    %v1250 = vld [vmem:[%s7 + $0x1a8] sm:$0xff]
    %v1251 = vld [vmem:[%s7 + $0x1b0] sm:$0xff]
    %v1252 = vld [vmem:[%s7 + $0x1b8] sm:$0xff]
    %v1253 = vld [vmem:[%s7 + $0x1c0] sm:$0xff]
    %v1254 = vld [vmem:[%s7 + $0x1c8] sm:$0xff]
    %v1255 = vld [vmem:[%s7 + $0x1d0] sm:$0xff]
    %v1256 = vld [vmem:[%s7 + $0x1d8] sm:$0x3f]
    %vm1257 = vcmask 769024
    %v1259 = vsel %vm1257, %v1196, 0
    %vm1261 = vcmask 1045504
    %v1263 = vsel %vm1261, %v1256, 0
    %1265 = vmatpush.msra.mxu0 %v1212
    %1266 = vmatpush.msra.mxu0 %v1211
    %1267 = vmatpush.msra.mxu0 %v1210
    %1268 = vmatpush.msra.mxu0 %v1209
    %1269 = vmatpush.msra.mxu0 %v1208
    %1270 = vmatpush.msra.mxu0 %v1207
    %1271 = vmatpush.msra.mxu0 %v1206
    %1272 = vmatpush.msra.mxu0 %v1205
    %1273 = vmatpush.msra.mxu0 %v1204
    %1274 = vmatpush.msra.mxu0 %v1203
    %1275 = vmatpush.msra.mxu0 %v1202
    %1276 = vmatpush.msra.mxu0 %v1201
    %1277 = vmatpush.msra.mxu0 %v1200
    %1278 = vmatpush.msra.mxu0 %v1199
    %1279 = vmatpush.msra.mxu0 %v1198
    %1280 = vmatpush.msra.mxu0 %v1197
    %1281 = vmatmul.f32.gmra.mxu0 %v1193
    %v1282 = vpop.f32.mrf.mxu0
    %v1283 = vadd.f32 0.0, %v1282
    %1284 = vdwg.mxu0
    %1285 = vmatpush.msra.mxu0 %v1228
    %1286 = vmatpush.msra.mxu0 %v1227
    %1287 = vmatpush.msra.mxu0 %v1226
    %1288 = vmatpush.msra.mxu0 %v1225
    %1289 = vmatpush.msra.mxu0 %v1224
    %1290 = vmatpush.msra.mxu0 %v1223
    %1291 = vmatpush.msra.mxu0 %v1222
    %1292 = vmatpush.msra.mxu0 %v1221
    %1293 = vmatpush.msra.mxu0 %v1220
    %1294 = vmatpush.msra.mxu0 %v1219
    %1295 = vmatpush.msra.mxu0 %v1218
    %1296 = vmatpush.msra.mxu0 %v1217
    %1297 = vmatpush.msra.mxu0 %v1216
    %1298 = vmatpush.msra.mxu0 %v1215
    %1299 = vmatpush.msra.mxu0 %v1214
    %1300 = vmatpush.msra.mxu0 %v1213
    %1301 = vmatmul.f32.gmra.mxu0 %v1194
    %v1302 = vpop.f32.mrf.mxu0
    %v1303 = vadd.f32 %v1283, %v1302
    %1304 = vdwg.mxu0
    %1305 = vmatpush.msra.mxu0 %v1244
    %1306 = vmatpush.msra.mxu0 %v1243
    %1307 = vmatpush.msra.mxu0 %v1242
    %1308 = vmatpush.msra.mxu0 %v1241
    %1309 = vmatpush.msra.mxu0 %v1240
    %1310 = vmatpush.msra.mxu0 %v1239
    %1311 = vmatpush.msra.mxu0 %v1238
    %1312 = vmatpush.msra.mxu0 %v1237
    %1313 = vmatpush.msra.mxu0 %v1236
    %1314 = vmatpush.msra.mxu0 %v1235
    %1315 = vmatpush.msra.mxu0 %v1234
    %1316 = vmatpush.msra.mxu0 %v1233
    %1317 = vmatpush.msra.mxu0 %v1232
    %1318 = vmatpush.msra.mxu0 %v1231
    %1319 = vmatpush.msra.mxu0 %v1230
    %1320 = vmatpush.msra.mxu0 %v1229
    %1321 = vmatmul.f32.gmra.mxu0 %v1195
    %v1322 = vpop.f32.mrf.mxu0
    %v1323 = vadd.f32 %v1303, %v1322
    %1324 = vdwg.mxu0
    %1325 = vmatpush.msra.mxu0 0.0
    %1326 = vmatpush.msra.mxu0 0.0
    %1327 = vmatpush.msra.mxu0 0.0
    %1328 = vmatpush.msra.mxu0 0.0
    %1329 = vmatpush.msra.mxu0 %v1263
    %1330 = vmatpush.msra.mxu0 %v1255
    %1331 = vmatpush.msra.mxu0 %v1254
    %1332 = vmatpush.msra.mxu0 %v1253
    %1333 = vmatpush.msra.mxu0 %v1252
    %1334 = vmatpush.msra.mxu0 %v1251
    %1335 = vmatpush.msra.mxu0 %v1250
    %1336 = vmatpush.msra.mxu0 %v1249
    %1337 = vmatpush.msra.mxu0 %v1248
    %1338 = vmatpush.msra.mxu0 %v1247
    %1339 = vmatpush.msra.mxu0 %v1246
    %1340 = vmatpush.msra.mxu0 %v1245
    %1341 = vmatmul.f32.gmra.mxu0 %v1259
    %v1342 = vpop.f32.mrf.mxu0
    %v1343 = vadd.f32 %v1323, %v1342
    %1344 = vdwg.mxu0
    %vm1345 = vcmask 60416
    %v1346 = vsel %vm1345, %v1343, 0.0
    %1347 = vadd.xlane.f32.xlu0 %v1346
    %v1348 = vpop.xlane.xlu0 %1347
    %v1349 = vrcp.pop 8.0
    %v1350 = vmul.f32 8.0, %v1349
    %v1351 = vsub.f32 1.0, %v1350
    %v1352 = vmul.f32 %v1349, %v1351
    %v1353 = vadd.f32 %v1349, %v1352
    %vm1354 = vweird.f32 %v1349
    %v1355 = vsel %vm1354, %v1349, %v1353
    %v1356 = vmul.f32 %v1348, %v1355
    %v1357 = vsub.f32 %v1343, %v1356
    %v1358 = vmul.f32 %v1357, %v1357
    %v1359 = vsel %vm1345, %v1358, 0.0
    %1360 = vadd.xlane.f32.xlu0 %v1359
    %v1361 = vpop.xlane.xlu0 %1360
    %v1362 = vmul.f32 %v1361, %v1355
    %v1363 = vadd.f32 %v1362, 1e-05
    %v1364 = vrsqrt.pop %v1363
    %v1365 = vmul.f32 %v1364, %v1363
    %v1366 = vmul.f32 %v1365, %v1364
    %v1367 = vmul.f32 0.5, %v1366
    %v1368 = vsub.f32 1.5, %v1367
    %v1369 = vmul.f32 %v1364, %v1368
    %vm1370 = vweird.f32 %v1363
    %vm1371 = vweird.f32 %v1364
    %vm1372 = vmor %vm1370, %vm1371
    %v1373 = vsel %vm1372, %v1364, %v1369
    %v1374 = vmul.f32 %v1357, %v1373
    %v1375 = vld [vmem:[%s8] sm:$0xf]
    %1377 = vset.pattern.permute.xlu0 0
    %1378 = vperm.xlu0 %1377, %v1375
    %v1379 = vpop.permute.xlu0 %1378
    %v1381 = vmul.f32 %v1374, %v1379
    %v1382 = vld [vmem:[%s9] sm:$0xf]
    %1384 = vset.pattern.permute.xlu0 0
    %1385 = vperm.xlu0 %1384, %v1382
    %v1386 = vpop.permute.xlu0 %1385
    %v1388 = vadd.f32 %v1381, %v1386
    %v1389 = vsel %vm1345, %v1388, -inf
    %v1390 = vrot.slane %v1389, 4
    %v1391 = vmax.f32 %v1389, %v1390
    %v1392 = vrot.slane %v1391, 2
    %v1393 = vmax.f32 %v1391, %v1392
    %v1394 = vrot.slane %v1393, 1
    %v1395 = vmax.f32 %v1393, %v1394
    %v1396 = vsub.f32 %v1388, %v1395
    %v1397 = vmul.f32 %v1396, 1.442695
    %v1398 = vpow.pop %v1397
    %v1399 = vsel %vm1345, %v1398, 0.0
    %v1400 = vrot.slane %v1399, 4
    %v1401 = vadd.f32 %v1399, %v1400
    %v1402 = vrot.slane %v1401, 2
    %v1403 = vadd.f32 %v1401, %v1402
    %v1404 = vrot.slane %v1403, 1
    %v1405 = vadd.f32 %v1403, %v1404
    %v1406 = vrcp.pop %v1405
    %v1407 = vmul.f32 %v1405, %v1406
    %v1408 = vsub.f32 1.0, %v1407
    %v1409 = vmul.f32 %v1406, %v1408
    %v1410 = vadd.f32 %v1406, %v1409
    %vm1411 = vweird.f32 %v1405
    %vm1412 = vweird.f32 %v1406
    %vm1413 = vmor %vm1411, %vm1412
    %v1414 = vsel %vm1413, %v1406, %v1410
    %v1415 = vand.u32 2147483647, %v1405
    %vm1416 = vcmp.eq.f32.partialorder %v1415, 8.507059e+37
    %v1417 = vand.u32 %v1405, 2147483648
    %v1418 = vor.u32 1.1754944e-38, %v1417
    %v1419 = vsel %vm1416, %v1418, %v1414
    %v1420 = vmul.f32 %v1398, %v1419
    %1421 = vst.msk [vmem:[#allocation2] sm:$0xf] %vm1345, %v1420
    // Predicated region
    $region42: #{tpu_custom_call.1} parent=1 // pred_check
      _
    $region43: #{tpu_custom_call.1} parent=1 // pred_check_branch
      %1423 = sbr.rel (0) target = $region45
    $region44: #{tpu_custom_call.1} parent=1 // pred_region
      %1425 = vsyncadd [#allocation3], 0
      %s1427 = sshll.u32 [#allocation2], 4
      %s1428 = int_to_ptr.vmem [resolvable:$true] %s1427
      %s1429 = sshll.u32 %s10, 4
      %s1430 = int_to_ptr.hbm [resolvable:$true] %s1429
      %1432 = dma.vmem_to_hbm [thread:$0]  %s1428, 64, %s1430, [#allocation3]
    $region45: #{tpu_custom_call.1} parent=1 // pred_fallthru
      _
    // Predicated region
    $region46: #{tpu_custom_call.1} parent=1 // pred_check
      _
    $region47: #{tpu_custom_call.1} parent=1 // pred_check_branch
      %1434 = sbr.rel (0) target = $region49
    $region48: #{tpu_custom_call.1} parent=1 // pred_region
      %1436 = dma.done [#allocation3], 64
    $region49: #{tpu_custom_call.1} parent=1 // pred_fallthru
      _
    %1437 = vsyncpa [#allocation3], 1

</llo_original>
